<compile_context>
chip_gen: v6e
topology: v6e:2x2x1
jax: 0.10.0
libtpu: 0.0.40
codegen_flags: <defaults>
</compile_context>

<pallas_src>
import jax
import jax.numpy as jnp
from jax.experimental import pallas as pl
from jax.experimental.pallas import tpu as pltpu


_LANE_W = 1024     # lane-dense last dim (multiple of 128): fewer, larger DMAs, unmasked vst
_TILE_ROWS = 512   # 512 x 1024 f32 = 2 MiB per block; 4 double-buffered blocks = 8 MiB VMEM


def _make_mul_kernel(weight: float):
    # Bake the scalar weight as an immediate constant in the kernel body.
    def _mul_kernel(x_ref, o_ref):
        o_ref[...] = (x_ref[...] * weight).astype(o_ref.dtype)
    return _mul_kernel


def mul(x: jax.Array, weight: float) -> jax.Array:
    """Compute x * weight with a tiled, pipelined Pallas TPU kernel (matches torch x * self.weight)."""
    orig_shape = x.shape
    orig_dtype = x.dtype
    # TODO(synk): integer x would promote to float under PyTorch type promotion; here the
    # output keeps x.dtype (float feature maps are the intended use in CIFAR-ResNet).

    n = x.size
    # Sublane packing per dtype: f32 -> 8 rows, bf16 -> 16, int8 -> 32.
    itemsize = jnp.dtype(orig_dtype).itemsize
    sublane = 8 * max(1, 4 // itemsize)
    slab = sublane * _LANE_W

    x_flat = jnp.reshape(x, (-1,))
    pad_n = ((n + slab - 1) // slab) * slab
    if pad_n != n:
        # Only pay the pad copy in the ragged case; evenly-divisible sizes skip it entirely.
        x_flat = jnp.pad(x_flat, (0, pad_n - n))

    rows = pad_n // _LANE_W
    x2d = jnp.reshape(x_flat, (rows, _LANE_W))

    tile_rows = min(_TILE_ROWS, rows)   # full-array block for small inputs, 512-row tiles otherwise
    grid = (pl.cdiv(rows, tile_rows),)

    out2d = pl.pallas_call(
        _make_mul_kernel(float(weight)),
        out_shape=jax.ShapeDtypeStruct((rows, _LANE_W), orig_dtype),
        grid=grid,
        in_specs=[pl.BlockSpec((tile_rows, _LANE_W), lambda i: (i, 0))],
        out_specs=pl.BlockSpec((tile_rows, _LANE_W), lambda i: (i, 0)),
        compiler_params=pltpu.CompilerParams(
            dimension_semantics=("parallel",)),   # v7x: shard tiles across both TensorCores
    )(x2d)

    out_flat = jnp.reshape(out2d, (-1,))
    if pad_n != n:
        out_flat = out_flat[:n]
    return jnp.reshape(out_flat, orig_shape)


if __name__ == "__main__":
    key = jax.random.PRNGKey(0)
    weight = 0.125  # same deterministic scalar as the torch `Mul(0.125)` pattern

    # Small NCHW input consistent with a CIFAR-ResNet feature map.
    x = jax.random.normal(key, (2, 4, 16, 16), dtype=jnp.float32)
    out = jax.block_until_ready(mul(x, weight))
    ref = x * weight
    assert out.shape == x.shape and out.dtype == x.dtype
    assert jnp.allclose(out, ref, rtol=1e-6, atol=1e-6)

    # Larger input to exercise the multi-tile, pipelined path (grid > 1).
    x_big = jax.random.normal(jax.random.PRNGKey(1), (32, 64, 32, 32), dtype=jnp.float32)
    out_big = jax.block_until_ready(mul(x_big, weight))
    assert jnp.allclose(out_big, x_big * weight, rtol=1e-6, atol=1e-6)

    print("KERNEL_OK")
</pallas_src>

<mosaic_0001>
module attributes {stable_mosaic.version = 11 : i64} {
  func.func @_mul_kernel(%arg0: i32, %arg1: memref<8x1024xf32, #tpu.memory_space<vmem>>, %arg2: memref<8x1024xf32, #tpu.memory_space<vmem>>) attributes {dimension_semantics = [#tpu.dimension_semantics<parallel>], iteration_bounds = array<i64: 1>, scalar_prefetch = 0 : i64, scratch_operands = 0 : i64, tpu.core_type = #tpu.core_type<tc>, window_params = [{transform_indices = @transform_0, window_bounds = array<i64: 8, 1024>}, {transform_indices = @transform_1, window_bounds = array<i64: 8, 1024>}]} {
    %c0 = arith.constant 0 : index
    %c0_0 = arith.constant 0 : index
    %0 = vector.load %arg1[%c0, %c0_0] : memref<8x1024xf32, #tpu.memory_space<vmem>>, vector<8x1024xf32>
    %cst = arith.constant 1.250000e-01 : f32
    %1 = vector.broadcast %cst : f32 to vector<8x1024xf32>
    %2 = arith.mulf %0, %1 : vector<8x1024xf32>
    %c0_1 = arith.constant 0 : index
    %c0_2 = arith.constant 0 : index
    %3 = vector.load %arg2[%c0_1, %c0_2] : memref<8x1024xf32, #tpu.memory_space<vmem>>, vector<8x1024xf32>
    tpu.vector_store %arg2[%c0_1, %c0_2], %2 {strides = array<i32>} : memref<8x1024xf32, #tpu.memory_space<vmem>>, vector<8x1024xf32>,
    return
  }
  func.func @transform_0(%arg0: i32) -> (i32, i32) {
    %c0_i32 = arith.constant 0 : i32
    %c0_i32_0 = arith.constant 0 : i32
    return %arg0, %c0_i32 : i32, i32
  }
  func.func @transform_1(%arg0: i32) -> (i32, i32) {
    %c0_i32 = arith.constant 0 : i32
    %c0_i32_0 = arith.constant 0 : i32
    return %arg0, %c0_i32 : i32, i32
  }
}

</mosaic_0001>

<llo_original>
// kernel: tpu_custom_call.1
$region0: #{tpu_custom_call.1}
  #allocation0 [shape = 'u32[]', space=smem, size = 0x4, offset = 0x4, fixed_abs, tag = 'smem constant byte address 0x4 - core index']
  #allocation1 [shape = 'u32[144,128]{1,0:T(1,128)}', space=vmem, size = 0x12000, scoped, tag = 'internal scratch']
  %s0 = inlined_call_operand.hbm [shape: f32[8,1024], index: 0, kind: input, shape index: {}]
  %s1 = inlined_call_operand.hbm [shape: f32[8,1024], index: 1, kind: output, shape index: {}]
  %s2 = sld [smem:[#allocation0]]
  $region18: #{tpu_custom_call.1} parent=0
    _
  %s4 = ssub.s32 1, %s2
  %s5 = scalar_select 0, %s4, %s2
  $region1: #{tpu_custom_call.1} parent=0
    #allocation2 [shape = 'u8[32768]{0}', space=vmem, size = 0x8000, scoped, tag = 'input window, operand 0, single buffered']
    #allocation3 [shape = 's32[1]{0}', space=sflag, size = 0x4, scoped, tag = 'scoped memory for tpu_custom_call.1']
    #allocation4 [shape = 's32[1]{0}', space=sflag, size = 0x4, scoped, tag = 'scoped memory for tpu_custom_call.1']
    #allocation5 [shape = 'u8[32768]{0}', space=vmem, size = 0x8000, scoped, tag = 'output window, operand 0, single buffered']
    %6 = vsyncpa [#allocation3], 0
    %7 = vsyncpa [#allocation4], 0
    // Predicated region
    $region2: #{tpu_custom_call.1} parent=1 // pred_check
      _
    $region3: #{tpu_custom_call.1} parent=1 // pred_check_branch
      %9 = sbr.rel (0) target = $region5
    $region4: #{tpu_custom_call.1} parent=1 // pred_region
      %s11 = ssub.s32 1024, 1024
      %12 = vsyncadd [#allocation3], %s11
      %s14 = sshll.u32 [#allocation2], 4
      %s15 = int_to_ptr.vmem [resolvable:$true] %s14
      %17 = dma.hbm_to_vmem [thread:$0]  %s0, 1024, %s15, [#allocation3]
    $region5: #{tpu_custom_call.1} parent=1 // pred_fallthru
      _
    // Predicated region
    $region6: #{tpu_custom_call.1} parent=1 // pred_check
      _
    $region7: #{tpu_custom_call.1} parent=1 // pred_check_branch
      %19 = sbr.rel (0) target = $region9
    $region8: #{tpu_custom_call.1} parent=1 // pred_region
      %20 = dma.done [#allocation3], 1024
    $region9: #{tpu_custom_call.1} parent=1 // pred_fallthru
      _
    %v21 = vld [vmem:[#allocation2] sm:$0xff]
    %v22 = vld [vmem:[#allocation2 + $0x8] sm:$0xff]
    %v23 = vld [vmem:[#allocation2 + $0x10] sm:$0xff]
    %v24 = vld [vmem:[#allocation2 + $0x18] sm:$0xff]
    %v25 = vld [vmem:[#allocation2 + $0x20] sm:$0xff]
    %v26 = vld [vmem:[#allocation2 + $0x28] sm:$0xff]
    %v27 = vld [vmem:[#allocation2 + $0x30] sm:$0xff]
    %v28 = vld [vmem:[#allocation2 + $0x38] sm:$0xff]
    %v29 = vmul.f32 %v21, 0.125
    %v30 = vmul.f32 %v22, 0.125
    %v31 = vmul.f32 %v23, 0.125
    %v32 = vmul.f32 %v24, 0.125
    %v33 = vmul.f32 %v25, 0.125
    %v34 = vmul.f32 %v26, 0.125
    %v35 = vmul.f32 %v27, 0.125
    %v36 = vmul.f32 %v28, 0.125
    %37 = vst [vmem:[#allocation5] sm:$0xff] %v29
    %38 = vst [vmem:[#allocation5 + $0x8] sm:$0xff] %v30
    %39 = vst [vmem:[#allocation5 + $0x10] sm:$0xff] %v31
    %40 = vst [vmem:[#allocation5 + $0x18] sm:$0xff] %v32
    %41 = vst [vmem:[#allocation5 + $0x20] sm:$0xff] %v33
    %42 = vst [vmem:[#allocation5 + $0x28] sm:$0xff] %v34
    %43 = vst [vmem:[#allocation5 + $0x30] sm:$0xff] %v35
    %44 = vst [vmem:[#allocation5 + $0x38] sm:$0xff] %v36
    // Predicated region
    $region10: #{tpu_custom_call.1} parent=1 // pred_check
      _
    $region11: #{tpu_custom_call.1} parent=1 // pred_check_branch
      %46 = sbr.rel (0) target = $region13
    $region12: #{tpu_custom_call.1} parent=1 // pred_region
      %s48 = ssub.s32 1024, 1024
      %49 = vsyncadd [#allocation4], %s48
      %s51 = sshll.u32 [#allocation5], 4
      %s52 = int_to_ptr.vmem [resolvable:$true] %s51
      %54 = dma.vmem_to_hbm [thread:$0]  %s52, 1024, %s1, [#allocation4]
    $region13: #{tpu_custom_call.1} parent=1 // pred_fallthru
      _
    // Predicated region
    $region14: #{tpu_custom_call.1} parent=1 // pred_check
      _
    $region15: #{tpu_custom_call.1} parent=1 // pred_check_branch
      %56 = sbr.rel (0) target = $region17
    $region16: #{tpu_custom_call.1} parent=1 // pred_region
      %57 = dma.done [#allocation4], 1024
    $region17: #{tpu_custom_call.1} parent=1 // pred_fallthru
      _
    %58 = vsyncpa [#allocation3], 1
    %59 = vsyncpa [#allocation4], 1

</llo_original>
